<compile_context>
chip_gen: v7x
topology: tpu7x:2x2x1
jax: 0.10.0
libtpu: 0.0.40
codegen_flags: <defaults>
</compile_context>

<pallas_src>
import jax
import jax.numpy as jnp
from jax import lax
from jax.experimental import pallas as pl
from jax.experimental.pallas import tpu as pltpu

INV_SQRT2 = 0.7071067811865476  # 1/sqrt(2)


def _round_up(x, m):
    return ((x + m - 1) // m) * m


def _adapter_kernel(x_ref, w1_ref, b1_ref, w2_ref, b2_ref, o_ref, acc_ref):
    # x_ref:  (tm, Din_pad)      row tile (resident across the k axis)
    # w1_ref: (Din_pad, th)      column chunk of linear1 weight
    # b1_ref: (1, th)            matching linear1 bias chunk
    # w2_ref: (th, Dout_pad)     row chunk of linear2 weight
    # b2_ref: (1, Dout_pad)      linear2 bias (resident)
    # o_ref:  (tm, Dout_pad)     output tile (written once, last k step)
    # acc_ref:(tm, Dout_pad) f32 accumulator scratch
    k = pl.program_id(1)

    @pl.when(k == 0)
    def _():
        # Fold the linear2 bias into the accumulator init.
        acc_ref[...] = jnp.broadcast_to(
            b2_ref[...].astype(jnp.float32), acc_ref.shape)

    # linear1 chunk: native-dtype operands straight to the MXU, f32 accumulate.
    h = jnp.dot(x_ref[...], w1_ref[...], preferred_element_type=jnp.float32)
    h = h + b1_ref[...].astype(jnp.float32)

    # exact (erf-based) GELU, matching torch.nn.GELU() default, in f32.
    h = 0.5 * h * (1.0 + lax.erf(h * INV_SQRT2))

    # linear2 partial product, accumulated in f32.
    acc_ref[...] += jnp.dot(h.astype(w2_ref.dtype), w2_ref[...],
                            preferred_element_type=jnp.float32)

    @pl.when(k == pl.num_programs(1) - 1)
    def _():
        o_ref[...] = acc_ref[...].astype(o_ref.dtype)


def image_adapter_forward(vision_outputs, w1, b1, w2, b2, *,
                          tile_m=256, tile_h=512):
    """vision_outputs: (..., Din).  Returns (..., Dout)."""
    din = vision_outputs.shape[-1]
    dout = w1.shape[1]
    assert w1.shape == (din, dout)
    assert w2.shape == (dout, dout)
    assert b1.shape == (dout,)
    assert b2.shape == (dout,)

    lead_shape = vision_outputs.shape[:-1]
    x2d = vision_outputs.reshape(-1, din)
    m = x2d.shape[0]
    out_dtype = vision_outputs.dtype

    # --- tiling / padding ----------------------------------------------------
    # Sublane packing: 8 rows for 32-bit, 16 for 16-bit, 32 for 8-bit dtypes.
    sub = max(8, 32 // max(1, jnp.dtype(x2d.dtype).itemsize))
    tile_m = _round_up(max(tile_m, sub), sub)
    tm = min(tile_m, _round_up(m, sub))        # row tile (sublane-aligned)
    m_pad = _round_up(m, tm)

    din_pad = _round_up(din, 128)              # lane-dense LHS contraction dim
    tile_h = _round_up(max(tile_h, 128), 128)
    th = min(tile_h, _round_up(dout, 128))     # hidden-dim chunk (mult. of 128)
    dout_pad = _round_up(dout, th)             # lane-dense output width

    x2d = jnp.pad(x2d, ((0, m_pad - m), (0, din_pad - din)))
    w1p = jnp.pad(w1, ((0, din_pad - din), (0, dout_pad - dout)))
    w2p = jnp.pad(w2, ((0, dout_pad - dout), (0, dout_pad - dout)))
    b1p = jnp.pad(b1, (0, dout_pad - dout)).reshape(1, dout_pad)
    b2p = jnp.pad(b2, (0, dout_pad - dout)).reshape(1, dout_pad)

    grid = (m_pad // tm, dout_pad // th)

    # --- VMEM budget (inputs/outputs are double-buffered by BlockSpec) -------
    isz = lambda a: jnp.dtype(a.dtype).itemsize
    vmem_bytes = (
        2 * tm * din_pad * isz(x2d)            # x tile
        + 2 * din_pad * th * isz(w1p)          # w1 chunk
        + 2 * th * isz(b1p)                    # b1 chunk
        + 2 * th * dout_pad * isz(w2p)         # w2 chunk
        + 2 * dout_pad * isz(b2p)              # b2
        + 2 * tm * dout_pad * jnp.dtype(out_dtype).itemsize   # out tile
        + tm * dout_pad * 4                    # f32 accumulator scratch
        + 2 * tm * th * 4                      # h intermediate headroom
    )
    vmem_limit = int(min(max(int(vmem_bytes * 1.5), 32 * 1024 * 1024),
                         64 * 1024 * 1024))

    cost = pl.CostEstimate(
        flops=2 * m * din * dout + 2 * m * dout * dout,
        transcendentals=m * dout,
        bytes_accessed=(x2d.size * isz(x2d) + w1p.size * isz(w1p)
                        + b1p.size * isz(b1p) + w2p.size * isz(w2p)
                        + b2p.size * isz(b2p)
                        + m_pad * dout_pad * jnp.dtype(out_dtype).itemsize),
    )

    out = pl.pallas_call(
        _adapter_kernel,
        out_shape=jax.ShapeDtypeStruct((m_pad, dout_pad), out_dtype),
        grid_spec=pltpu.PrefetchScalarGridSpec(
            num_scalar_prefetch=0,
            grid=grid,
            in_specs=[
                pl.BlockSpec((tm, din_pad), lambda i, k: (i, 0)),    # x rows
                pl.BlockSpec((din_pad, th), lambda i, k: (0, k)),    # w1 chunk
                pl.BlockSpec((1, th), lambda i, k: (0, k)),          # b1 chunk
                pl.BlockSpec((th, dout_pad), lambda i, k: (k, 0)),   # w2 chunk
                pl.BlockSpec((1, dout_pad), lambda i, k: (0, 0)),    # b2
            ],
            out_specs=pl.BlockSpec((tm, dout_pad), lambda i, k: (i, 0)),
            scratch_shapes=[pltpu.VMEM((tm, dout_pad), jnp.float32)],
        ),
        compiler_params=pltpu.CompilerParams(
            dimension_semantics=("parallel", "arbitrary"),
            vmem_limit_bytes=vmem_limit,
        ),
        cost_estimate=cost,
    )(x2d, w1p, b1p, w2p, b2p)

    out = out[:m, :dout]
    return out.reshape(*lead_shape, dout)


def init_image_adapter_params(key, input_features, output_features,
                              dtype=jnp.float32):
    """Deterministic parameter init (mirrors nn.Linear's U(-1/sqrt(fan_in), .))."""
    k1, k2, k3, k4 = jax.random.split(key, 4)
    bound1 = 1.0 / (input_features ** 0.5)
    bound2 = 1.0 / (output_features ** 0.5)
    # stored as (in, out) so the kernel does x @ w (PyTorch stores (out, in))
    w1 = jax.random.uniform(k1, (input_features, output_features),
                            dtype, -bound1, bound1)
    b1 = jax.random.uniform(k2, (output_features,), dtype, -bound1, bound1)
    w2 = jax.random.uniform(k3, (output_features, output_features),
                            dtype, -bound2, bound2)
    b2 = jax.random.uniform(k4, (output_features,), dtype, -bound2, bound2)
    return w1, b1, w2, b2


if __name__ == "__main__":
    key = jax.random.PRNGKey(0)
    k_x, k_p = jax.random.split(key)

    batch, seq = 2, 8
    input_features, output_features = 32, 32

    vision_outputs = jax.random.normal(
        k_x, (batch, seq, input_features), dtype=jnp.float32)

    w1, b1, w2, b2 = init_image_adapter_params(
        k_p, input_features, output_features)

    out = image_adapter_forward(vision_outputs, w1, b1, w2, b2)
    out = jax.block_until_ready(out)

    # reference check in plain JAX
    h_ref = vision_outputs @ w1 + b1
    h_ref = 0.5 * h_ref * (1.0 + lax.erf(h_ref * INV_SQRT2))
    ref = h_ref @ w2 + b2
    assert out.shape == (batch, seq, output_features)
    assert jnp.allclose(out, ref, atol=1e-4, rtol=1e-4), \
        float(jnp.max(jnp.abs(out - ref)))

    print("KERNEL_OK")
</pallas_src>

<mosaic_0001>
module attributes {stable_mosaic.version = 11 : i64} {
  func.func @_adapter_kernel(%arg0: i32, %arg1: i32, %arg2: memref<16x128xf32, #tpu.memory_space<vmem>>, %arg3: memref<128x128xf32, #tpu.memory_space<vmem>>, %arg4: memref<1x128xf32, #tpu.memory_space<vmem>>, %arg5: memref<128x128xf32, #tpu.memory_space<vmem>>, %arg6: memref<1x128xf32, #tpu.memory_space<vmem>>, %arg7: memref<16x128xf32, #tpu.memory_space<vmem>>, %arg8: memref<16x128xf32, #tpu.memory_space<vmem>>) attributes {dimension_semantics = [#tpu.dimension_semantics<parallel>, #tpu.dimension_semantics<arbitrary>], iteration_bounds = array<i64: 1, 1>, scalar_prefetch = 0 : i64, scratch_operands = 1 : i64, tpu.core_type = #tpu.core_type<tc>, window_params = [{transform_indices = @transform_0, window_bounds = array<i64: 16, 128>}, {transform_indices = @transform_1, window_bounds = array<i64: 128, 128>}, {transform_indices = @transform_2, window_bounds = array<i64: 1, 128>}, {transform_indices = @transform_3, window_bounds = array<i64: 128, 128>}, {pipeline_mode = #tpu.pipeline_mode<synchronous>, transform_indices = @transform_4, window_bounds = array<i64: 1, 128>}, {transform_indices = @transform_5, window_bounds = array<i64: 16, 128>}]} {
    %c0_i32 = arith.constant 0 : i32
    %0 = arith.cmpi eq, %arg1, %c0_i32 : i32
    %1 = arith.extui %0 : i1 to i32
    %c0_i32_0 = arith.constant 0 : i32
    %2 = arith.cmpi ne, %1, %c0_i32_0 : i32
    scf.if %2 {
      %c0_18 = arith.constant 0 : index
      %c0_19 = arith.constant 0 : index
      %25 = vector.load %arg6[%c0_18, %c0_19] : memref<1x128xf32, #tpu.memory_space<vmem>>, vector<1x128xf32>
      %26 = vector.shape_cast %25 : vector<1x128xf32> to vector<1x128xf32>
      %27 = vector.broadcast %26 : vector<1x128xf32> to vector<16x128xf32>
      %c0_20 = arith.constant 0 : index
      %c0_21 = arith.constant 0 : index
      %28 = vector.load %arg8[%c0_20, %c0_21] : memref<16x128xf32, #tpu.memory_space<vmem>>, vector<16x128xf32>
      tpu.vector_store %arg8[%c0_20, %c0_21], %27 {strides = array<i32>} : memref<16x128xf32, #tpu.memory_space<vmem>>, vector<16x128xf32>,
    } else {
    }
    %c0 = arith.constant 0 : index
    %c0_1 = arith.constant 0 : index
    %3 = vector.load %arg2[%c0, %c0_1] : memref<16x128xf32, #tpu.memory_space<vmem>>, vector<16x128xf32>
    %c0_2 = arith.constant 0 : index
    %c0_3 = arith.constant 0 : index
    %4 = vector.load %arg3[%c0_2, %c0_3] : memref<128x128xf32, #tpu.memory_space<vmem>>, vector<128x128xf32>
    %cst = arith.constant dense<0.000000e+00> : vector<16x128xf32>
    %5 = tpu.matmul %3, %4, %cst {dimension_numbers = #tpu.dot_dimension_numbers<[1], [0], [0], [1], [0, 0, 1, 1], [], []>} : vector<16x128xf32>, vector<128x128xf32>, vector<16x128xf32> -> vector<16x128xf32>
    %c0_4 = arith.constant 0 : index
    %c0_5 = arith.constant 0 : index
    %6 = vector.load %arg4[%c0_4, %c0_5] : memref<1x128xf32, #tpu.memory_space<vmem>>, vector<1x128xf32>
    %7 = vector.broadcast %6 : vector<1x128xf32> to vector<16x128xf32>
    %8 = arith.addf %5, %7 : vector<16x128xf32>
    %cst_6 = arith.constant 5.000000e-01 : f32
    %9 = vector.broadcast %cst_6 : f32 to vector<16x128xf32>
    %10 = arith.mulf %9, %8 : vector<16x128xf32>
    %cst_7 = arith.constant 0.707106769 : f32
    %11 = vector.broadcast %cst_7 : f32 to vector<16x128xf32>
    %12 = arith.mulf %8, %11 : vector<16x128xf32>
    %13 = math.erf %12 : vector<16x128xf32>
    %cst_8 = arith.constant 1.000000e+00 : f32
    %14 = vector.broadcast %cst_8 : f32 to vector<16x128xf32>
    %15 = arith.addf %14, %13 : vector<16x128xf32>
    %16 = arith.mulf %10, %15 : vector<16x128xf32>
    %c0_9 = arith.constant 0 : index
    %c0_10 = arith.constant 0 : index
    %17 = vector.load %arg8[%c0_9, %c0_10] : memref<16x128xf32, #tpu.memory_space<vmem>>, vector<16x128xf32>
    %c0_11 = arith.constant 0 : index
    %c0_12 = arith.constant 0 : index
    %18 = vector.load %arg5[%c0_11, %c0_12] : memref<128x128xf32, #tpu.memory_space<vmem>>, vector<128x128xf32>
    %cst_13 = arith.constant dense<0.000000e+00> : vector<16x128xf32>
    %19 = tpu.matmul %16, %18, %cst_13 {dimension_numbers = #tpu.dot_dimension_numbers<[1], [0], [0], [1], [0, 0, 1, 1], [], []>} : vector<16x128xf32>, vector<128x128xf32>, vector<16x128xf32> -> vector<16x128xf32>
    %20 = arith.addf %17, %19 : vector<16x128xf32>
    %c0_14 = arith.constant 0 : index
    %c0_15 = arith.constant 0 : index
    %21 = vector.load %arg8[%c0_14, %c0_15] : memref<16x128xf32, #tpu.memory_space<vmem>>, vector<16x128xf32>
    tpu.vector_store %arg8[%c0_14, %c0_15], %20 {strides = array<i32>} : memref<16x128xf32, #tpu.memory_space<vmem>>, vector<16x128xf32>,
    %c0_i32_16 = arith.constant 0 : i32
    %22 = arith.cmpi eq, %arg1, %c0_i32_16 : i32
    %23 = arith.extui %22 : i1 to i32
    %c0_i32_17 = arith.constant 0 : i32
    %24 = arith.cmpi ne, %23, %c0_i32_17 : i32
    scf.if %24 {
      %c0_18 = arith.constant 0 : index
      %c0_19 = arith.constant 0 : index
      %25 = vector.load %arg8[%c0_18, %c0_19] : memref<16x128xf32, #tpu.memory_space<vmem>>, vector<16x128xf32>
      %c0_20 = arith.constant 0 : index
      %c0_21 = arith.constant 0 : index
      %26 = vector.load %arg7[%c0_20, %c0_21] : memref<16x128xf32, #tpu.memory_space<vmem>>, vector<16x128xf32>
      tpu.vector_store %arg7[%c0_20, %c0_21], %25 {strides = array<i32>} : memref<16x128xf32, #tpu.memory_space<vmem>>, vector<16x128xf32>,
    } else {
    }
    return
  }
  func.func @transform_0(%arg0: i32, %arg1: i32) -> (i32, i32) {
    %c0_i32 = arith.constant 0 : i32
    %c0_i32_0 = arith.constant 0 : i32
    return %arg0, %c0_i32 : i32, i32
  }
  func.func @transform_1(%arg0: i32, %arg1: i32) -> (i32, i32) {
    %c0_i32 = arith.constant 0 : i32
    %c0_i32_0 = arith.constant 0 : i32
    return %c0_i32, %arg1 : i32, i32
  }
  func.func @transform_2(%arg0: i32, %arg1: i32) -> (i32, i32) {
    %c0_i32 = arith.constant 0 : i32
    %c0_i32_0 = arith.constant 0 : i32
    return %c0_i32, %arg1 : i32, i32
  }
  func.func @transform_3(%arg0: i32, %arg1: i32) -> (i32, i32) {
    %c0_i32 = arith.constant 0 : i32
    %c0_i32_0 = arith.constant 0 : i32
    return %arg1, %c0_i32 : i32, i32
  }
  func.func @transform_4(%arg0: i32, %arg1: i32) -> (i32, i32) {
    %c0_i32 = arith.constant 0 : i32
    %c0_i32_0 = arith.constant 0 : i32
    %c0_i32_1 = arith.constant 0 : i32
    return %c0_i32, %c0_i32_0 : i32, i32
  }
  func.func @transform_5(%arg0: i32, %arg1: i32) -> (i32, i32) {
    %c0_i32 = arith.constant 0 : i32
    %c0_i32_0 = arith.constant 0 : i32
    return %arg0, %c0_i32 : i32, i32
  }
}

</mosaic_0001>

<llo_original>
// kernel: tpu_custom_call.1
$region0: #{tpu_custom_call.1}
  #allocation0 [shape = 'u32[]', space=smem, size = 0x4, offset = 0x4, fixed_abs, tag = 'smem constant byte address 0x4 - core index']
  #allocation1 [shape = 'u32[144,128]{1,0:T(1,128)}', space=vmem, size = 0x12000, scoped, tag = 'internal scratch']
  #allocation2 [shape = 'f32[16,128]{1,0:T(8,128)}', space=vmem, size = 0x2000, scoped, tag = 'scratch operand']
  %s0 = inlined_call_operand.hbm [shape: f32[16,128], index: 0, kind: input, shape index: {}]
  %s1 = inlined_call_operand.hbm [shape: f32[128,128], index: 1, kind: input, shape index: {}]
  %s2 = inlined_call_operand.vmem [shape: f32[1,128], index: 2, kind: input, shape index: {}]
  %s3 = inlined_call_operand.hbm [shape: f32[128,128], index: 3, kind: input, shape index: {}]
  %s4 = inlined_call_operand.vmem [shape: f32[1,128], index: 4, kind: input, shape index: {}]
  %s5 = inlined_call_operand.hbm [shape: f32[16,128], index: 5, kind: output, shape index: {}]
  %s6 = sld [smem:[#allocation0]]
  $region50: #{tpu_custom_call.1} parent=0
    _
  %s8 = ssub.s32 1, %s6
  %s9 = scalar_select 0, %s8, %s6
  $region1: #{tpu_custom_call.1} parent=0
    #allocation3 [shape = 'u8[8192]{0}', space=vmem, size = 0x2000, scoped, tag = 'input window, operand 0, single buffered']
    #allocation4 [shape = 's32[1]{0}', space=sflag, size = 0x4, scoped, tag = 'scoped memory for tpu_custom_call.1']
    #allocation5 [shape = 's32[1]{0}', space=sflag, size = 0x4, scoped, tag = 'scoped memory for tpu_custom_call.1']
    #allocation6 [shape = 'u8[65536]{0}', space=vmem, size = 0x10000, scoped, tag = 'input window, operand 1, single buffered']
    #allocation7 [shape = 's32[1]{0}', space=sflag, size = 0x4, scoped, tag = 'scoped memory for tpu_custom_call.1']
    #allocation8 [shape = 'u8[65536]{0}', space=vmem, size = 0x10000, scoped, tag = 'input window, operand 3, single buffered']
    #allocation9 [shape = 'u8[8192]{0}', space=vmem, size = 0x2000, scoped, tag = 'output window, operand 0, single buffered']
    %10 = vsyncpa [#allocation4], 0
    %11 = vsyncpa [#allocation7], 0
    %12 = vsyncpa [#allocation5], 0
    // Predicated region
    $region2: #{tpu_custom_call.1} parent=1 // pred_check
      _
    $region3: #{tpu_custom_call.1} parent=1 // pred_check_branch
      %14 = sbr.rel (0) target = $region5
    $region4: #{tpu_custom_call.1} parent=1 // pred_region
      %s16 = ssub.s32 256, 256
      %17 = vsyncadd [#allocation4], %s16
      %s18 = sshll.u32 [#allocation3], 4
      %s19 = int_to_ptr.vmem [resolvable:$true] %s18
      %24 = dma.hbm_to_vmem [thread:$0]  %s0, 256, %s19, [#allocation4], 128, 128, 8
    $region5: #{tpu_custom_call.1} parent=1 // pred_fallthru
      _
    // Predicated region
    $region6: #{tpu_custom_call.1} parent=1 // pred_check
      _
    $region7: #{tpu_custom_call.1} parent=1 // pred_check_branch
      %26 = sbr.rel (0) target = $region9
    $region8: #{tpu_custom_call.1} parent=1 // pred_region
      %s28 = ssub.s32 2048, 2048
      %29 = vsyncadd [#allocation7], %s28
      %s30 = sshll.u32 [#allocation6], 4
      %s31 = int_to_ptr.vmem [resolvable:$true] %s30
      %36 = dma.hbm_to_vmem [thread:$0]  %s1, 2048, %s31, [#allocation7], 128, 128, 8
    $region9: #{tpu_custom_call.1} parent=1 // pred_fallthru
      _
    // Predicated region
    $region10: #{tpu_custom_call.1} parent=1 // pred_check
      _
    $region11: #{tpu_custom_call.1} parent=1 // pred_check_branch
      %38 = sbr.rel (0) target = $region13
    $region12: #{tpu_custom_call.1} parent=1 // pred_region
      _
    $region13: #{tpu_custom_call.1} parent=1 // pred_fallthru
      _
    // Predicated region
    $region14: #{tpu_custom_call.1} parent=1 // pred_check
      _
    $region15: #{tpu_custom_call.1} parent=1 // pred_check_branch
      %40 = sbr.rel (0) target = $region17
    $region16: #{tpu_custom_call.1} parent=1 // pred_region
      %s42 = ssub.s32 2048, 2048
      %43 = vsyncadd [#allocation7], %s42
      %s44 = sshll.u32 [#allocation8], 4
      %s45 = int_to_ptr.vmem [resolvable:$true] %s44
      %50 = dma.hbm_to_vmem [thread:$0]  %s3, 2048, %s45, [#allocation7], 128, 128, 8
    $region17: #{tpu_custom_call.1} parent=1 // pred_fallthru
      _
    // Predicated region
    $region18: #{tpu_custom_call.1} parent=1 // pred_check
      _
    $region19: #{tpu_custom_call.1} parent=1 // pred_check_branch
      %52 = sbr.rel (0) target = $region21
    $region20: #{tpu_custom_call.1} parent=1 // pred_region
      _
    $region21: #{tpu_custom_call.1} parent=1 // pred_fallthru
      _
    // Predicated region
    $region22: #{tpu_custom_call.1} parent=1 // pred_check
      _
    $region23: #{tpu_custom_call.1} parent=1 // pred_check_branch
      %54 = sbr.rel (0) target = $region25
    $region24: #{tpu_custom_call.1} parent=1 // pred_region
      %55 = dma.done [#allocation4], 256
    $region25: #{tpu_custom_call.1} parent=1 // pred_fallthru
      _
    // Predicated region
    $region26: #{tpu_custom_call.1} parent=1 // pred_check
      _
    $region27: #{tpu_custom_call.1} parent=1 // pred_check_branch
      %57 = sbr.rel (0) target = $region29
    $region28: #{tpu_custom_call.1} parent=1 // pred_region
      %58 = dma.done [#allocation7], 2048
    $region29: #{tpu_custom_call.1} parent=1 // pred_fallthru
      _
    // Predicated region
    $region30: #{tpu_custom_call.1} parent=1 // pred_check
      _
    $region31: #{tpu_custom_call.1} parent=1 // pred_check_branch
      %60 = sbr.rel (0) target = $region33
    $region32: #{tpu_custom_call.1} parent=1 // pred_region
      %61 = dma.done [#allocation7], 2048
    $region33: #{tpu_custom_call.1} parent=1 // pred_fallthru
      _
    %p62 = scmp.eq.s32.totalorder 0, 0
    // Predicated region
    $region34: #{tpu_custom_call.1} parent=1 // pred_check
      %p63 = pneg %p62
    $region35: #{tpu_custom_call.1} parent=1 // pred_check_branch
      %65 = sbr.rel (%p63) target = $region37
    $region36: #{tpu_custom_call.1} parent=1 // pred_region
      %v66 = vld [vmem:[%s4] sm:$0x1]
      %v68 = vlaneseq
      %v69 = vshrl.u32 %v68, 7
      %v70 = vsub.s32 0, %v69
      %v71 = vrot.slane %v66, %v70
      %73 = vst [vmem:[#allocation2] sm:$0xff] %v71
      %74 = vst [vmem:[#allocation2 + $0x8] sm:$0xff] %v71
    $region37: #{tpu_custom_call.1} parent=1 // pred_fallthru
      _
    %v75 = vld [vmem:[#allocation3] sm:$0xff]
    %v76 = vld [vmem:[#allocation3 + $0x8] sm:$0xff]
    %v77 = vld [vmem:[#allocation6] sm:$0xff]
    %v78 = vld [vmem:[#allocation6 + $0x8] sm:$0xff]
    %v79 = vld [vmem:[#allocation6 + $0x10] sm:$0xff]
    %v80 = vld [vmem:[#allocation6 + $0x18] sm:$0xff]
    %v81 = vld [vmem:[#allocation6 + $0x20] sm:$0xff]
    %v82 = vld [vmem:[#allocation6 + $0x28] sm:$0xff]
    %v83 = vld [vmem:[#allocation6 + $0x30] sm:$0xff]
    %v84 = vld [vmem:[#allocation6 + $0x38] sm:$0xff]
    %v85 = vld [vmem:[#allocation6 + $0x40] sm:$0xff]
    %v86 = vld [vmem:[#allocation6 + $0x48] sm:$0xff]
    %v87 = vld [vmem:[#allocation6 + $0x50] sm:$0xff]
    %v88 = vld [vmem:[#allocation6 + $0x58] sm:$0xff]
    %v89 = vld [vmem:[#allocation6 + $0x60] sm:$0xff]
    %v90 = vld [vmem:[#allocation6 + $0x68] sm:$0xff]
    %v91 = vld [vmem:[#allocation6 + $0x70] sm:$0xff]
    %v92 = vld [vmem:[#allocation6 + $0x78] sm:$0xff]
    %v93 = vld [vmem:[%s2] sm:$0x1]
    %v95 = vlaneseq
    %v96 = vshrl.u32 %v95, 7
    %v97 = vsub.s32 0, %v96
    %v98 = vrot.slane %v93, %v97
    %100 = vmatprep.subr.mxu0 0.0
    %101 = vmatpush1.msra.mxu0 %v77
    %102 = vmatprep.subr.mxu0 0.0
    %103 = vmatpush1.msra.mxu0 %v78
    %104 = vmatprep.subr.mxu0 0.0
    %105 = vmatpush1.msra.mxu0 %v79
    %106 = vmatprep.subr.mxu0 0.0
    %107 = vmatpush1.msra.mxu0 %v80
    %108 = vmatprep.subr.mxu0 0.0
    %109 = vmatpush1.msra.mxu0 %v81
    %110 = vmatprep.subr.mxu0 0.0
    %111 = vmatpush1.msra.mxu0 %v82
    %112 = vmatprep.subr.mxu0 0.0
    %113 = vmatpush1.msra.mxu0 %v83
    %114 = vmatprep.subr.mxu0 0.0
    %115 = vmatpush1.msra.mxu0 %v84
    %116 = vmatprep.subr.mxu0 0.0
    %117 = vmatpush1.msra.mxu0 %v85
    %118 = vmatprep.subr.mxu0 0.0
    %119 = vmatpush1.msra.mxu0 %v86
    %120 = vmatprep.subr.mxu0 0.0
    %121 = vmatpush1.msra.mxu0 %v87
    %122 = vmatprep.subr.mxu0 0.0
    %123 = vmatpush1.msra.mxu0 %v88
    %124 = vmatprep.subr.mxu0 0.0
    %125 = vmatpush1.msra.mxu0 %v89
    %126 = vmatprep.subr.mxu0 0.0
    %127 = vmatpush1.msra.mxu0 %v90
    %128 = vmatprep.subr.mxu0 0.0
    %129 = vmatpush1.msra.mxu0 %v91
    %130 = vmatprep.subr.mxu0 0.0
    %131 = vmatpush1.msra.mxu0 %v92
    %132 = vmatprep.subr.mxu0 0.0
    %133 = vmatpush1.msra.mxu0 0.0
    %134 = vmatprep.subr.mxu0 0.0
    %135 = vmatpush1.msra.mxu0 0.0
    %136 = vmatprep.subr.mxu0 0.0
    %137 = vmatpush1.msra.mxu0 0.0
    %138 = vmatprep.subr.mxu0 0.0
    %139 = vmatpush1.msra.mxu0 0.0
    %140 = vmatprep.subr.mxu0 0.0
    %141 = vmatpush1.msra.mxu0 0.0
    %142 = vmatprep.subr.mxu0 0.0
    %143 = vmatpush1.msra.mxu0 0.0
    %144 = vmatprep.subr.mxu0 0.0
    %145 = vmatpush1.msra.mxu0 0.0
    %146 = vmatprep.subr.mxu0 0.0
    %147 = vmatpush1.msra.mxu0 0.0
    %148 = vmatprep.subr.mxu0 0.0
    %149 = vmatpush1.msra.mxu0 0.0
    %150 = vmatprep.subr.mxu0 0.0
    %151 = vmatpush1.msra.mxu0 0.0
    %152 = vmatprep.subr.mxu0 0.0
    %153 = vmatpush1.msra.mxu0 0.0
    %154 = vmatprep.subr.mxu0 0.0
    %155 = vmatpush1.msra.mxu0 0.0
    %156 = vmatprep.subr.mxu0 0.0
    %157 = vmatpush1.msra.mxu0 0.0
    %158 = vmatprep.subr.mxu0 0.0
    %159 = vmatpush1.msra.mxu0 0.0
    %160 = vmatprep.subr.mxu0 0.0
    %161 = vmatpush1.msra.mxu0 0.0
    %162 = vmatprep.subr.mxu0 0.0
    %163 = vmatpush1.msra.mxu0 0.0
    %164 = vmatprep.mubr.f32.mxu0 0.0
    %165 = vmatmul.mubr.f32.gmra.mrb[0].mxu0 %v75
    %v166 = vpop.f32.mrb[0].mxu0
    %v167 = vadd.f32 %v98, %v166
    %v168 = vpop.f32.mrb[0].mxu0
    %169 = vmatprep.mubr.f32.mxu0 0.0
    %170 = vmatmul.mubr.f32.gmra.mrb[0].mxu0 %v76
    %v171 = vpop.f32.mrb[0].mxu0
    %v172 = vadd.f32 %v98, %v171
    %v173 = vpop.f32.mrb[0].mxu0
    %174 = vdwg.mxu0
    %v175 = vmul.f32 %v167, 0.5
    %v176 = vmul.f32 %v172, 0.5
    %v177 = vmul.f32 %v167, 0.70710677
    %v178 = vmul.f32 %v172, 0.70710677
    %v179 = verf.f32.pop %v177
    %v180 = verf.f32.pop %v178
    %v181 = vadd.f32 %v179, 1.0
    %v182 = vadd.f32 %v180, 1.0
    %v183 = vmul.f32 %v175, %v181
    %v184 = vmul.f32 %v176, %v182
    %v185 = vld [vmem:[#allocation2] sm:$0xff]
    %v186 = vld [vmem:[#allocation2 + $0x8] sm:$0xff]
    %v187 = vld [vmem:[#allocation8] sm:$0xff]
    %v188 = vld [vmem:[#allocation8 + $0x8] sm:$0xff]
    %v189 = vld [vmem:[#allocation8 + $0x10] sm:$0xff]
    %v190 = vld [vmem:[#allocation8 + $0x18] sm:$0xff]
    %v191 = vld [vmem:[#allocation8 + $0x20] sm:$0xff]
    %v192 = vld [vmem:[#allocation8 + $0x28] sm:$0xff]
    %v193 = vld [vmem:[#allocation8 + $0x30] sm:$0xff]
    %v194 = vld [vmem:[#allocation8 + $0x38] sm:$0xff]
    %v195 = vld [vmem:[#allocation8 + $0x40] sm:$0xff]
    %v196 = vld [vmem:[#allocation8 + $0x48] sm:$0xff]
    %v197 = vld [vmem:[#allocation8 + $0x50] sm:$0xff]
    %v198 = vld [vmem:[#allocation8 + $0x58] sm:$0xff]
    %v199 = vld [vmem:[#allocation8 + $0x60] sm:$0xff]
    %v200 = vld [vmem:[#allocation8 + $0x68] sm:$0xff]
    %v201 = vld [vmem:[#allocation8 + $0x70] sm:$0xff]
    %v202 = vld [vmem:[#allocation8 + $0x78] sm:$0xff]
    %203 = vmatprep.subr.mxu0 0.0
    %204 = vmatpush1.msra.mxu0 %v187
    %205 = vmatprep.subr.mxu0 0.0
    %206 = vmatpush1.msra.mxu0 %v188
    %207 = vmatprep.subr.mxu0 0.0
    %208 = vmatpush1.msra.mxu0 %v189
    %209 = vmatprep.subr.mxu0 0.0
    %210 = vmatpush1.msra.mxu0 %v190
    %211 = vmatprep.subr.mxu0 0.0
    %212 = vmatpush1.msra.mxu0 %v191
    %213 = vmatprep.subr.mxu0 0.0
    %214 = vmatpush1.msra.mxu0 %v192
    %215 = vmatprep.subr.mxu0 0.0
    %216 = vmatpush1.msra.mxu0 %v193
    %217 = vmatprep.subr.mxu0 0.0
    %218 = vmatpush1.msra.mxu0 %v194
    %219 = vmatprep.subr.mxu0 0.0
    %220 = vmatpush1.msra.mxu0 %v195
    %221 = vmatprep.subr.mxu0 0.0
    %222 = vmatpush1.msra.mxu0 %v196
    %223 = vmatprep.subr.mxu0 0.0
    %224 = vmatpush1.msra.mxu0 %v197
    %225 = vmatprep.subr.mxu0 0.0
    %226 = vmatpush1.msra.mxu0 %v198
    %227 = vmatprep.subr.mxu0 0.0
    %228 = vmatpush1.msra.mxu0 %v199
    %229 = vmatprep.subr.mxu0 0.0
    %230 = vmatpush1.msra.mxu0 %v200
    %231 = vmatprep.subr.mxu0 0.0
    %232 = vmatpush1.msra.mxu0 %v201
    %233 = vmatprep.subr.mxu0 0.0
    %234 = vmatpush1.msra.mxu0 %v202
    %235 = vmatprep.subr.mxu0 0.0
    %236 = vmatpush1.msra.mxu0 0.0
    %237 = vmatprep.subr.mxu0 0.0
    %238 = vmatpush1.msra.mxu0 0.0
    %239 = vmatprep.subr.mxu0 0.0
    %240 = vmatpush1.msra.mxu0 0.0
    %241 = vmatprep.subr.mxu0 0.0
    %242 = vmatpush1.msra.mxu0 0.0
    %243 = vmatprep.subr.mxu0 0.0
    %244 = vmatpush1.msra.mxu0 0.0
    %245 = vmatprep.subr.mxu0 0.0
    %246 = vmatpush1.msra.mxu0 0.0
    %247 = vmatprep.subr.mxu0 0.0
    %248 = vmatpush1.msra.mxu0 0.0
    %249 = vmatprep.subr.mxu0 0.0
    %250 = vmatpush1.msra.mxu0 0.0
    %251 = vmatprep.subr.mxu0 0.0
    %252 = vmatpush1.msra.mxu0 0.0
    %253 = vmatprep.subr.mxu0 0.0
    %254 = vmatpush1.msra.mxu0 0.0
    %255 = vmatprep.subr.mxu0 0.0
    %256 = vmatpush1.msra.mxu0 0.0
    %257 = vmatprep.subr.mxu0 0.0
    %258 = vmatpush1.msra.mxu0 0.0
    %259 = vmatprep.subr.mxu0 0.0
    %260 = vmatpush1.msra.mxu0 0.0
    %261 = vmatprep.subr.mxu0 0.0
    %262 = vmatpush1.msra.mxu0 0.0
    %263 = vmatprep.subr.mxu0 0.0
    %264 = vmatpush1.msra.mxu0 0.0
    %265 = vmatprep.subr.mxu0 0.0
    %266 = vmatpush1.msra.mxu0 0.0
    %267 = vmatprep.mubr.f32.mxu0 0.0
    %268 = vmatmul.mubr.f32.gmra.mrb[0].mxu0 %v183
    %v269 = vpop.f32.mrb[0].mxu0
    %v270 = vadd.f32 0.0, %v269
    %v271 = vpop.f32.mrb[0].mxu0
    %272 = vmatprep.mubr.f32.mxu0 0.0
    %273 = vmatmul.mubr.f32.gmra.mrb[0].mxu0 %v184
    %v274 = vpop.f32.mrb[0].mxu0
    %v275 = vadd.f32 0.0, %v274
    %v276 = vpop.f32.mrb[0].mxu0
    %277 = vdwg.mxu0
    %v278 = vadd.f32 %v185, %v270
    %v279 = vadd.f32 %v186, %v275
    %280 = vst [vmem:[#allocation2] sm:$0xff] %v278
    %281 = vst [vmem:[#allocation2 + $0x8] sm:$0xff] %v279
    // Predicated region
    $region38: #{tpu_custom_call.1} parent=1 // pred_check
      %p282 = pneg %p62
    $region39: #{tpu_custom_call.1} parent=1 // pred_check_branch
      %284 = sbr.rel (%p282) target = $region41
    $region40: #{tpu_custom_call.1} parent=1 // pred_region
      %v285 = vld [vmem:[#allocation2] sm:$0xff]
      %v286 = vld [vmem:[#allocation2 + $0x8] sm:$0xff]
      %287 = vst [vmem:[#allocation9] sm:$0xff] %v285
      %288 = vst [vmem:[#allocation9 + $0x8] sm:$0xff] %v286
    $region41: #{tpu_custom_call.1} parent=1 // pred_fallthru
      _
    // Predicated region
    $region42: #{tpu_custom_call.1} parent=1 // pred_check
      _
    $region43: #{tpu_custom_call.1} parent=1 // pred_check_branch
      %290 = sbr.rel (0) target = $region45
    $region44: #{tpu_custom_call.1} parent=1 // pred_region
      %s292 = ssub.s32 256, 256
      %293 = vsyncadd [#allocation5], %s292
      %s294 = sshll.u32 [#allocation9], 4
      %s295 = int_to_ptr.vmem [resolvable:$true] %s294
      %300 = dma.vmem_to_hbm [thread:$0]  %s295, 256, %s5, [#allocation5], 128, 128, 8
    $region45: #{tpu_custom_call.1} parent=1 // pred_fallthru
      _
    // Predicated region
    $region46: #{tpu_custom_call.1} parent=1 // pred_check
      _
    $region47: #{tpu_custom_call.1} parent=1 // pred_check_branch
      %302 = sbr.rel (0) target = $region49
    $region48: #{tpu_custom_call.1} parent=1 // pred_region
      %303 = dma.done [#allocation5], 256
    $region49: #{tpu_custom_call.1} parent=1 // pred_fallthru
      _
    %304 = vsyncpa [#allocation4], 1
    %305 = vsyncpa [#allocation7], 1
    %306 = vsyncpa [#allocation5], 1

</llo_original>
